<compile_context>
chip_gen: v7x
topology: tpu7x:2x2x1
jax: 0.10.0
libtpu: 0.0.40
codegen_flags: <defaults>
</compile_context>

<pallas_src>
import jax
import jax.numpy as jnp
from jax.experimental import pallas as pl


def _make_kernel(N1, N2, K1):
    v_cols = N1 + N2 + K1 + N1     # width of v = [a | b | c | a]

    def kernel(x1_ref, x2_ref, x3_ref, x4_ref, x5_ref, o_ref):
        x1 = x1_ref[...]
        # Three independent tiny MXU dots (f32 accumulation).
        a = jnp.dot(x1, x2_ref[...], preferred_element_type=jnp.float32)
        b = jnp.dot(x3_ref[...], x4_ref[...], preferred_element_type=jnp.float32)
        c = jnp.dot(x5_ref[...], x1, preferred_element_type=jnp.float32)

        # Assemble v once in vregs, then exactly two stores: out = [v | v].
        v = jnp.concatenate([a, b, c, a], axis=1).astype(o_ref.dtype)
        o_ref[:, 0:v_cols] = v
        o_ref[:, v_cols:2 * v_cols] = v

    return kernel


def cat_mm(x1, x2, x3, x4, x5):
    M, K1 = x1.shape
    K1b, N1 = x2.shape
    Mb, K2 = x3.shape
    K2b, N2 = x4.shape
    Mc, Md = x5.shape
    assert K1b == K1 and Mb == M and K2b == K2 and Mc == M and Md == M, (
        "inconsistent operand shapes for cat_mm")

    out_dtype = jnp.result_type(x1, x2, x3, x4, x5)
    # Cast only if needed (no-op for matching dtypes; removed by XLA).
    x1, x2, x3, x4, x5 = (x.astype(out_dtype) for x in (x1, x2, x3, x4, x5))

    v_cols = N1 + N2 + K1 + N1
    out_cols = 2 * v_cols

    # Single-block kernel: everything fits in VMEM, so each BlockSpec covers
    # the full array (block_shape == array shape -> block index (0,...,0)).
    full = lambda shape: pl.BlockSpec(shape, lambda: (0,) * len(shape))

    return pl.pallas_call(
        _make_kernel(N1, N2, K1),
        out_shape=jax.ShapeDtypeStruct((M, out_cols), out_dtype),
        grid=(),
        in_specs=[full(x1.shape), full(x2.shape), full(x3.shape),
                  full(x4.shape), full(x5.shape)],
        out_specs=full((M, out_cols)),
    )(x1, x2, x3, x4, x5)


def _reference(x1, x2, x3, x4, x5):
    a = x1 @ x2
    b = x3 @ x4
    c = x5 @ x1
    v = jnp.concatenate([a, b, c, a], axis=1)
    return jnp.concatenate([v, v], axis=1)


if __name__ == "__main__":
    key = jax.random.PRNGKey(0)
    k1, k2, k3, k4, k5 = jax.random.split(key, 5)

    M, K1, N1, K2, N2 = 8, 16, 32, 16, 32
    x1 = jax.random.normal(k1, (M, K1), dtype=jnp.float32)
    x2 = jax.random.normal(k2, (K1, N1), dtype=jnp.float32)
    x3 = jax.random.normal(k3, (M, K2), dtype=jnp.float32)
    x4 = jax.random.normal(k4, (K2, N2), dtype=jnp.float32)
    x5 = jax.random.normal(k5, (M, M), dtype=jnp.float32)

    out = jax.block_until_ready(cat_mm(x1, x2, x3, x4, x5))
    ref = _reference(x1, x2, x3, x4, x5)

    assert out.shape == ref.shape, (out.shape, ref.shape)
    assert out.dtype == ref.dtype, (out.dtype, ref.dtype)
    assert jnp.allclose(out, ref, atol=1e-5, rtol=1e-5), float(
        jnp.max(jnp.abs(out - ref))
    )
    print("KERNEL_OK")
</pallas_src>

<mosaic_0001>
module attributes {stable_mosaic.version = 11 : i64} {
  func.func @kernel(%arg0: memref<8x16xf32, #tpu.memory_space<vmem>>, %arg1: memref<16x32xf32, #tpu.memory_space<vmem>>, %arg2: memref<8x16xf32, #tpu.memory_space<vmem>>, %arg3: memref<16x32xf32, #tpu.memory_space<vmem>>, %arg4: memref<8x8xf32, #tpu.memory_space<vmem>>, %arg5: memref<8x224xf32, #tpu.memory_space<vmem>>) attributes {dimension_semantics = [], scalar_prefetch = 0 : i64, scratch_operands = 0 : i64, tpu.core_type = #tpu.core_type<tc>} {
    %c0 = arith.constant 0 : index
    %c0_0 = arith.constant 0 : index
    %0 = vector.load %arg0[%c0, %c0_0] : memref<8x16xf32, #tpu.memory_space<vmem>>, vector<8x16xf32>
    %c0_1 = arith.constant 0 : index
    %c0_2 = arith.constant 0 : index
    %1 = vector.load %arg1[%c0_1, %c0_2] : memref<16x32xf32, #tpu.memory_space<vmem>>, vector<16x32xf32>
    %cst = arith.constant dense<0.000000e+00> : vector<8x32xf32>
    %2 = tpu.matmul %0, %1, %cst {dimension_numbers = #tpu.dot_dimension_numbers<[1], [0], [0], [1], [0, 0, 1, 1], [], []>} : vector<8x16xf32>, vector<16x32xf32>, vector<8x32xf32> -> vector<8x32xf32>
    %c0_3 = arith.constant 0 : index
    %c0_4 = arith.constant 0 : index
    %3 = vector.load %arg2[%c0_3, %c0_4] : memref<8x16xf32, #tpu.memory_space<vmem>>, vector<8x16xf32>
    %c0_5 = arith.constant 0 : index
    %c0_6 = arith.constant 0 : index
    %4 = vector.load %arg3[%c0_5, %c0_6] : memref<16x32xf32, #tpu.memory_space<vmem>>, vector<16x32xf32>
    %cst_7 = arith.constant dense<0.000000e+00> : vector<8x32xf32>
    %5 = tpu.matmul %3, %4, %cst_7 {dimension_numbers = #tpu.dot_dimension_numbers<[1], [0], [0], [1], [0, 0, 1, 1], [], []>} : vector<8x16xf32>, vector<16x32xf32>, vector<8x32xf32> -> vector<8x32xf32>
    %c0_8 = arith.constant 0 : index
    %c0_9 = arith.constant 0 : index
    %6 = vector.load %arg4[%c0_8, %c0_9] : memref<8x8xf32, #tpu.memory_space<vmem>>, vector<8x8xf32>
    %cst_10 = arith.constant dense<0.000000e+00> : vector<8x16xf32>
    %7 = tpu.matmul %6, %0, %cst_10 {dimension_numbers = #tpu.dot_dimension_numbers<[1], [0], [0], [1], [0, 0, 1, 1], [], []>} : vector<8x8xf32>, vector<8x16xf32>, vector<8x16xf32> -> vector<8x16xf32>
    %8 = tpu.concatenate %2, %5, %7, %2 in 1 : vector<8x32xf32>, vector<8x32xf32>, vector<8x16xf32>, vector<8x32xf32> -> vector<8x112xf32>
    %c0_11 = arith.constant 0 : index
    %c0_12 = arith.constant 0 : index
    %9 = vector.load %arg5[%c0_11, %c0_12] : memref<8x224xf32, #tpu.memory_space<vmem>>, vector<8x112xf32>
    tpu.vector_store %arg5[%c0_11, %c0_12], %8 {strides = array<i32>} : memref<8x224xf32, #tpu.memory_space<vmem>>, vector<8x112xf32>,
    %c0_13 = arith.constant 0 : index
    %c112 = arith.constant 112 : index
    %10 = vector.load %arg5[%c0_13, %c112] : memref<8x224xf32, #tpu.memory_space<vmem>>, vector<8x112xf32>
    tpu.vector_store %arg5[%c0_13, %c112], %8 {strides = array<i32>} : memref<8x224xf32, #tpu.memory_space<vmem>>, vector<8x112xf32>,
    return
  }
}

</mosaic_0001>

<llo_original>
// kernel: tpu_custom_call.1
$region0: #{tpu_custom_call.1}
  #allocation0 [shape = 'u32[]', space=smem, size = 0x4, offset = 0x4, fixed_abs, tag = 'smem constant byte address 0x4 - core index']
  #allocation1 [shape = 'u32[144,128]{1,0:T(1,128)}', space=vmem, size = 0x12000, scoped, tag = 'internal scratch']
  %s0 = inlined_call_operand.hbm [shape: f32[8,16], index: 0, kind: input, shape index: {}]
  %s1 = inlined_call_operand.hbm [shape: f32[16,32], index: 1, kind: input, shape index: {}]
  %s2 = inlined_call_operand.hbm [shape: f32[8,16], index: 2, kind: input, shape index: {}]
  %s3 = inlined_call_operand.hbm [shape: f32[16,32], index: 3, kind: input, shape index: {}]
  %s4 = inlined_call_operand.vmem [shape: f32[8,8], index: 4, kind: input, shape index: {}]
  %s5 = inlined_call_operand.hbm [shape: f32[8,224], index: 5, kind: output, shape index: {}]
  %s6 = sld [smem:[#allocation0]]
  $region46: #{tpu_custom_call.1} parent=0
    _
  %s8 = ssub.s32 1, %s6
  %s9 = scalar_select 0, %s8, %s6
  $region1: #{tpu_custom_call.1} parent=0
    #allocation2 [shape = 'u8[4096]{0}', space=vmem, size = 0x1000, scoped, tag = 'input window, operand 0, single buffered']
    #allocation3 [shape = 's32[1]{0}', space=sflag, size = 0x4, scoped, tag = 'scoped memory for tpu_custom_call.1']
    #allocation4 [shape = 's32[1]{0}', space=sflag, size = 0x4, scoped, tag = 'scoped memory for tpu_custom_call.1']
    #allocation5 [shape = 'u8[8192]{0}', space=vmem, size = 0x2000, scoped, tag = 'input window, operand 1, single buffered']
    #allocation6 [shape = 's32[1]{0}', space=sflag, size = 0x4, scoped, tag = 'scoped memory for tpu_custom_call.1']
    #allocation7 [shape = 'u8[4096]{0}', space=vmem, size = 0x1000, scoped, tag = 'input window, operand 2, single buffered']
    #allocation8 [shape = 'u8[8192]{0}', space=vmem, size = 0x2000, scoped, tag = 'input window, operand 3, single buffered']
    #allocation9 [shape = 's32[1]{0}', space=sflag, size = 0x4, scoped, tag = 'scoped memory for tpu_custom_call.1']
    #allocation10 [shape = 'u8[8192]{0}', space=vmem, size = 0x2000, scoped, tag = 'output window, operand 0, single buffered']
    %10 = vsyncpa [#allocation3], 0
    %11 = vsyncpa [#allocation6], 0
    %12 = vsyncpa [#allocation9], 0
    %13 = vsyncpa [#allocation4], 0
    // Predicated region
    $region2: #{tpu_custom_call.1} parent=1 // pred_check
      _
    $region3: #{tpu_custom_call.1} parent=1 // pred_check_branch
      %15 = sbr.rel (0) target = $region5
    $region4: #{tpu_custom_call.1} parent=1 // pred_region
      %s17 = ssub.s32 128, 128
      %18 = vsyncadd [#allocation3], %s17
      %s20 = sshll.u32 [#allocation2], 4
      %s21 = int_to_ptr.vmem [resolvable:$true] %s20
      %23 = dma.hbm_to_vmem [thread:$0]  %s0, 128, %s21, [#allocation3]
    $region5: #{tpu_custom_call.1} parent=1 // pred_fallthru
      _
    // Predicated region
    $region6: #{tpu_custom_call.1} parent=1 // pred_check
      _
    $region7: #{tpu_custom_call.1} parent=1 // pred_check_branch
      %25 = sbr.rel (0) target = $region9
    $region8: #{tpu_custom_call.1} parent=1 // pred_region
      %s27 = ssub.s32 256, 256
      %28 = vsyncadd [#allocation6], %s27
      %s29 = sshll.u32 [#allocation5], 4
      %s30 = int_to_ptr.vmem [resolvable:$true] %s29
      %35 = dma.hbm_to_vmem [thread:$0]  %s1, 256, %s30, [#allocation6], 128, 128, 8
    $region9: #{tpu_custom_call.1} parent=1 // pred_fallthru
      _
    // Predicated region
    $region10: #{tpu_custom_call.1} parent=1 // pred_check
      _
    $region11: #{tpu_custom_call.1} parent=1 // pred_check_branch
      %37 = sbr.rel (0) target = $region13
    $region12: #{tpu_custom_call.1} parent=1 // pred_region
      %s39 = ssub.s32 128, 128
      %40 = vsyncadd [#allocation6], %s39
      %s42 = sshll.u32 [#allocation7], 4
      %s43 = int_to_ptr.vmem [resolvable:$true] %s42
      %45 = dma.hbm_to_vmem [thread:$0]  %s2, 128, %s43, [#allocation6]
    $region13: #{tpu_custom_call.1} parent=1 // pred_fallthru
      _
    // Predicated region
    $region14: #{tpu_custom_call.1} parent=1 // pred_check
      _
    $region15: #{tpu_custom_call.1} parent=1 // pred_check_branch
      %47 = sbr.rel (0) target = $region17
    $region16: #{tpu_custom_call.1} parent=1 // pred_region
      %s49 = ssub.s32 256, 256
      %50 = vsyncadd [#allocation9], %s49
      %s51 = sshll.u32 [#allocation8], 4
      %s52 = int_to_ptr.vmem [resolvable:$true] %s51
      %57 = dma.hbm_to_vmem [thread:$0]  %s3, 256, %s52, [#allocation9], 128, 128, 8
    $region17: #{tpu_custom_call.1} parent=1 // pred_fallthru
      _
    // Predicated region
    $region18: #{tpu_custom_call.1} parent=1 // pred_check
      _
    $region19: #{tpu_custom_call.1} parent=1 // pred_check_branch
      %59 = sbr.rel (0) target = $region21
    $region20: #{tpu_custom_call.1} parent=1 // pred_region
      _
    $region21: #{tpu_custom_call.1} parent=1 // pred_fallthru
      _
    // Predicated region
    $region22: #{tpu_custom_call.1} parent=1 // pred_check
      _
    $region23: #{tpu_custom_call.1} parent=1 // pred_check_branch
      %61 = sbr.rel (0) target = $region25
    $region24: #{tpu_custom_call.1} parent=1 // pred_region
      %62 = dma.done [#allocation3], 128
    $region25: #{tpu_custom_call.1} parent=1 // pred_fallthru
      _
    // Predicated region
    $region26: #{tpu_custom_call.1} parent=1 // pred_check
      _
    $region27: #{tpu_custom_call.1} parent=1 // pred_check_branch
      %64 = sbr.rel (0) target = $region29
    $region28: #{tpu_custom_call.1} parent=1 // pred_region
      %65 = dma.done [#allocation6], 256
    $region29: #{tpu_custom_call.1} parent=1 // pred_fallthru
      _
    // Predicated region
    $region30: #{tpu_custom_call.1} parent=1 // pred_check
      _
    $region31: #{tpu_custom_call.1} parent=1 // pred_check_branch
      %67 = sbr.rel (0) target = $region33
    $region32: #{tpu_custom_call.1} parent=1 // pred_region
      %68 = dma.done [#allocation6], 128
    $region33: #{tpu_custom_call.1} parent=1 // pred_fallthru
      _
    // Predicated region
    $region34: #{tpu_custom_call.1} parent=1 // pred_check
      _
    $region35: #{tpu_custom_call.1} parent=1 // pred_check_branch
      %70 = sbr.rel (0) target = $region37
    $region36: #{tpu_custom_call.1} parent=1 // pred_region
      %71 = dma.done [#allocation9], 256
    $region37: #{tpu_custom_call.1} parent=1 // pred_fallthru
      _
    %v72 = vld [vmem:[#allocation2] sm:$0xff]
    %v73 = vld [vmem:[#allocation5] sm:$0xff]
    %v74 = vld [vmem:[#allocation5 + $0x8] sm:$0xff]
    %vm75 = vcmask 130048
    %v77 = vsel %vm75, %v72, 0
    %79 = vmatprep.subr.mxu0 0.0
    %80 = vmatpush1.msra.mxu0 %v73
    %81 = vmatprep.subr.mxu0 0.0
    %82 = vmatpush1.msra.mxu0 %v74
    %83 = vmatprep.subr.mxu0 0.0
    %84 = vmatpush1.msra.mxu0 0.0
    %85 = vmatprep.subr.mxu0 0.0
    %86 = vmatpush1.msra.mxu0 0.0
    %87 = vmatprep.subr.mxu0 0.0
    %88 = vmatpush1.msra.mxu0 0.0
    %89 = vmatprep.subr.mxu0 0.0
    %90 = vmatpush1.msra.mxu0 0.0
    %91 = vmatprep.subr.mxu0 0.0
    %92 = vmatpush1.msra.mxu0 0.0
    %93 = vmatprep.subr.mxu0 0.0
    %94 = vmatpush1.msra.mxu0 0.0
    %95 = vmatprep.subr.mxu0 0.0
    %96 = vmatpush1.msra.mxu0 0.0
    %97 = vmatprep.subr.mxu0 0.0
    %98 = vmatpush1.msra.mxu0 0.0
    %99 = vmatprep.subr.mxu0 0.0
    %100 = vmatpush1.msra.mxu0 0.0
    %101 = vmatprep.subr.mxu0 0.0
    %102 = vmatpush1.msra.mxu0 0.0
    %103 = vmatprep.subr.mxu0 0.0
    %104 = vmatpush1.msra.mxu0 0.0
    %105 = vmatprep.subr.mxu0 0.0
    %106 = vmatpush1.msra.mxu0 0.0
    %107 = vmatprep.subr.mxu0 0.0
    %108 = vmatpush1.msra.mxu0 0.0
    %109 = vmatprep.subr.mxu0 0.0
    %110 = vmatpush1.msra.mxu0 0.0
    %111 = vmatprep.subr.mxu0 0.0
    %112 = vmatpush1.msra.mxu0 0.0
    %113 = vmatprep.subr.mxu0 0.0
    %114 = vmatpush1.msra.mxu0 0.0
    %115 = vmatprep.subr.mxu0 0.0
    %116 = vmatpush1.msra.mxu0 0.0
    %117 = vmatprep.subr.mxu0 0.0
    %118 = vmatpush1.msra.mxu0 0.0
    %119 = vmatprep.subr.mxu0 0.0
    %120 = vmatpush1.msra.mxu0 0.0
    %121 = vmatprep.subr.mxu0 0.0
    %122 = vmatpush1.msra.mxu0 0.0
    %123 = vmatprep.subr.mxu0 0.0
    %124 = vmatpush1.msra.mxu0 0.0
    %125 = vmatprep.subr.mxu0 0.0
    %126 = vmatpush1.msra.mxu0 0.0
    %127 = vmatprep.subr.mxu0 0.0
    %128 = vmatpush1.msra.mxu0 0.0
    %129 = vmatprep.subr.mxu0 0.0
    %130 = vmatpush1.msra.mxu0 0.0
    %131 = vmatprep.subr.mxu0 0.0
    %132 = vmatpush1.msra.mxu0 0.0
    %133 = vmatprep.subr.mxu0 0.0
    %134 = vmatpush1.msra.mxu0 0.0
    %135 = vmatprep.subr.mxu0 0.0
    %136 = vmatpush1.msra.mxu0 0.0
    %137 = vmatprep.subr.mxu0 0.0
    %138 = vmatpush1.msra.mxu0 0.0
    %139 = vmatprep.subr.mxu0 0.0
    %140 = vmatpush1.msra.mxu0 0.0
    %141 = vmatprep.subr.mxu0 0.0
    %142 = vmatpush1.msra.mxu0 0.0
    %143 = vmatprep.mubr.f32.mxu0 0.0
    %144 = vmatmul.mubr.f32.gmra.mrb[0].mxu0 %v77
    %v145 = vpop.f32.mrb[0].mxu0
    %v146 = vadd.f32 0.0, %v145
    %v147 = vpop.f32.mrb[0].mxu0
    %148 = vdwg.mxu0
    %v149 = vld [vmem:[#allocation7] sm:$0xff]
    %v150 = vld [vmem:[#allocation8] sm:$0xff]
    %v151 = vld [vmem:[#allocation8 + $0x8] sm:$0xff]
    %v153 = vsel %vm75, %v149, 0
    %155 = vmatprep.subr.mxu0 0.0
    %156 = vmatpush1.msra.mxu0 %v150
    %157 = vmatprep.subr.mxu0 0.0
    %158 = vmatpush1.msra.mxu0 %v151
    %159 = vmatprep.subr.mxu0 0.0
    %160 = vmatpush1.msra.mxu0 0.0
    %161 = vmatprep.subr.mxu0 0.0
    %162 = vmatpush1.msra.mxu0 0.0
    %163 = vmatprep.subr.mxu0 0.0
    %164 = vmatpush1.msra.mxu0 0.0
    %165 = vmatprep.subr.mxu0 0.0
    %166 = vmatpush1.msra.mxu0 0.0
    %167 = vmatprep.subr.mxu0 0.0
    %168 = vmatpush1.msra.mxu0 0.0
    %169 = vmatprep.subr.mxu0 0.0
    %170 = vmatpush1.msra.mxu0 0.0
    %171 = vmatprep.subr.mxu0 0.0
    %172 = vmatpush1.msra.mxu0 0.0
    %173 = vmatprep.subr.mxu0 0.0
    %174 = vmatpush1.msra.mxu0 0.0
    %175 = vmatprep.subr.mxu0 0.0
    %176 = vmatpush1.msra.mxu0 0.0
    %177 = vmatprep.subr.mxu0 0.0
    %178 = vmatpush1.msra.mxu0 0.0
    %179 = vmatprep.subr.mxu0 0.0
    %180 = vmatpush1.msra.mxu0 0.0
    %181 = vmatprep.subr.mxu0 0.0
    %182 = vmatpush1.msra.mxu0 0.0
    %183 = vmatprep.subr.mxu0 0.0
    %184 = vmatpush1.msra.mxu0 0.0
    %185 = vmatprep.subr.mxu0 0.0
    %186 = vmatpush1.msra.mxu0 0.0
    %187 = vmatprep.subr.mxu0 0.0
    %188 = vmatpush1.msra.mxu0 0.0
    %189 = vmatprep.subr.mxu0 0.0
    %190 = vmatpush1.msra.mxu0 0.0
    %191 = vmatprep.subr.mxu0 0.0
    %192 = vmatpush1.msra.mxu0 0.0
    %193 = vmatprep.subr.mxu0 0.0
    %194 = vmatpush1.msra.mxu0 0.0
    %195 = vmatprep.subr.mxu0 0.0
    %196 = vmatpush1.msra.mxu0 0.0
    %197 = vmatprep.subr.mxu0 0.0
    %198 = vmatpush1.msra.mxu0 0.0
    %199 = vmatprep.subr.mxu0 0.0
    %200 = vmatpush1.msra.mxu0 0.0
    %201 = vmatprep.subr.mxu0 0.0
    %202 = vmatpush1.msra.mxu0 0.0
    %203 = vmatprep.subr.mxu0 0.0
    %204 = vmatpush1.msra.mxu0 0.0
    %205 = vmatprep.subr.mxu0 0.0
    %206 = vmatpush1.msra.mxu0 0.0
    %207 = vmatprep.subr.mxu0 0.0
    %208 = vmatpush1.msra.mxu0 0.0
    %209 = vmatprep.subr.mxu0 0.0
    %210 = vmatpush1.msra.mxu0 0.0
    %211 = vmatprep.subr.mxu0 0.0
    %212 = vmatpush1.msra.mxu0 0.0
    %213 = vmatprep.subr.mxu0 0.0
    %214 = vmatpush1.msra.mxu0 0.0
    %215 = vmatprep.subr.mxu0 0.0
    %216 = vmatpush1.msra.mxu0 0.0
    %217 = vmatprep.subr.mxu0 0.0
    %218 = vmatpush1.msra.mxu0 0.0
    %219 = vmatprep.mubr.f32.mxu0 0.0
    %220 = vmatmul.mubr.f32.gmra.mrb[0].mxu0 %v153
    %v221 = vpop.f32.mrb[0].mxu0
    %v222 = vadd.f32 0.0, %v221
    %v223 = vpop.f32.mrb[0].mxu0
    %224 = vdwg.mxu0
    %v225 = vld [vmem:[%s4] sm:$0xff]
    %vm226 = vcmask 64512
    %v228 = vsel %vm226, %v225, 0
    %230 = vmatprep.subr.mxu0 0.0
    %231 = vmatpush1.msra.mxu0 %v72
    %232 = vmatprep.subr.mxu0 0.0
    %233 = vmatpush1.msra.mxu0 0.0
    %234 = vmatprep.subr.mxu0 0.0
    %235 = vmatpush1.msra.mxu0 0.0
    %236 = vmatprep.subr.mxu0 0.0
    %237 = vmatpush1.msra.mxu0 0.0
    %238 = vmatprep.subr.mxu0 0.0
    %239 = vmatpush1.msra.mxu0 0.0
    %240 = vmatprep.subr.mxu0 0.0
    %241 = vmatpush1.msra.mxu0 0.0
    %242 = vmatprep.subr.mxu0 0.0
    %243 = vmatpush1.msra.mxu0 0.0
    %244 = vmatprep.subr.mxu0 0.0
    %245 = vmatpush1.msra.mxu0 0.0
    %246 = vmatprep.subr.mxu0 0.0
    %247 = vmatpush1.msra.mxu0 0.0
    %248 = vmatprep.subr.mxu0 0.0
    %249 = vmatpush1.msra.mxu0 0.0
    %250 = vmatprep.subr.mxu0 0.0
    %251 = vmatpush1.msra.mxu0 0.0
    %252 = vmatprep.subr.mxu0 0.0
    %253 = vmatpush1.msra.mxu0 0.0
    %254 = vmatprep.subr.mxu0 0.0
    %255 = vmatpush1.msra.mxu0 0.0
    %256 = vmatprep.subr.mxu0 0.0
    %257 = vmatpush1.msra.mxu0 0.0
    %258 = vmatprep.subr.mxu0 0.0
    %259 = vmatpush1.msra.mxu0 0.0
    %260 = vmatprep.subr.mxu0 0.0
    %261 = vmatpush1.msra.mxu0 0.0
    %262 = vmatprep.subr.mxu0 0.0
    %263 = vmatpush1.msra.mxu0 0.0
    %264 = vmatprep.subr.mxu0 0.0
    %265 = vmatpush1.msra.mxu0 0.0
    %266 = vmatprep.subr.mxu0 0.0
    %267 = vmatpush1.msra.mxu0 0.0
    %268 = vmatprep.subr.mxu0 0.0
    %269 = vmatpush1.msra.mxu0 0.0
    %270 = vmatprep.subr.mxu0 0.0
    %271 = vmatpush1.msra.mxu0 0.0
    %272 = vmatprep.subr.mxu0 0.0
    %273 = vmatpush1.msra.mxu0 0.0
    %274 = vmatprep.subr.mxu0 0.0
    %275 = vmatpush1.msra.mxu0 0.0
    %276 = vmatprep.subr.mxu0 0.0
    %277 = vmatpush1.msra.mxu0 0.0
    %278 = vmatprep.subr.mxu0 0.0
    %279 = vmatpush1.msra.mxu0 0.0
    %280 = vmatprep.subr.mxu0 0.0
    %281 = vmatpush1.msra.mxu0 0.0
    %282 = vmatprep.subr.mxu0 0.0
    %283 = vmatpush1.msra.mxu0 0.0
    %284 = vmatprep.subr.mxu0 0.0
    %285 = vmatpush1.msra.mxu0 0.0
    %286 = vmatprep.subr.mxu0 0.0
    %287 = vmatpush1.msra.mxu0 0.0
    %288 = vmatprep.subr.mxu0 0.0
    %289 = vmatpush1.msra.mxu0 0.0
    %290 = vmatprep.subr.mxu0 0.0
    %291 = vmatpush1.msra.mxu0 0.0
    %292 = vmatprep.subr.mxu0 0.0
    %293 = vmatpush1.msra.mxu0 0.0
    %294 = vmatprep.mubr.f32.mxu0 0.0
    %295 = vmatmul.mubr.f32.gmra.mrb[0].mxu0 %v228
    %v296 = vpop.f32.mrb[0].mxu0
    %v297 = vadd.f32 0.0, %v296
    %v298 = vpop.f32.mrb[0].mxu0
    %299 = vdwg.mxu0
    %301 = vrot.lane.b32.xlu0 %v222, 32
    %v302 = vpop.permute.xlu0 %301
    %305 = vrot.lane.b32.xlu0 %v297, 64
    %v306 = vpop.permute.xlu0 %305
    %309 = vrot.lane.b32.xlu0 %v146, 80
    %v310 = vpop.permute.xlu0 %309
    %vm312 = vcmask 261120
    %v313 = vsel %vm312, %v146, %v302
    %vm314 = vcmask 523264
    %v315 = vsel %vm314, %v313, %v306
    %vm316 = vcmask 654336
    %v317 = vsel %vm316, %v315, %v310
    %vm318 = vcmask 916480
    %319 = vst.msk [vmem:[#allocation10] sm:$0xff] %vm318, %v317
    %321 = vrot.lane.b32.xlu0 %v317, 112
    %v322 = vpop.permute.xlu0 %321
    %vm324 = vcmask 1048448
    %325 = vst.msk [vmem:[#allocation10] sm:$0xff] %vm324, %v322
    %vm326 = vcmask 785408
    %327 = vst.msk [vmem:[#allocation10 + $0x8] sm:$0xff] %vm326, %v322
    // Predicated region
    $region38: #{tpu_custom_call.1} parent=1 // pred_check
      _
    $region39: #{tpu_custom_call.1} parent=1 // pred_check_branch
      %329 = sbr.rel (0) target = $region41
    $region40: #{tpu_custom_call.1} parent=1 // pred_region
      %s331 = ssub.s32 256, 256
      %332 = vsyncadd [#allocation4], %s331
      %s334 = sshll.u32 [#allocation10], 4
      %s335 = int_to_ptr.vmem [resolvable:$true] %s334
      %337 = dma.vmem_to_hbm [thread:$0]  %s335, 256, %s5, [#allocation4]
    $region41: #{tpu_custom_call.1} parent=1 // pred_fallthru
      _
    // Predicated region
    $region42: #{tpu_custom_call.1} parent=1 // pred_check
      _
    $region43: #{tpu_custom_call.1} parent=1 // pred_check_branch
      %339 = sbr.rel (0) target = $region45
    $region44: #{tpu_custom_call.1} parent=1 // pred_region
      %340 = dma.done [#allocation4], 256
    $region45: #{tpu_custom_call.1} parent=1 // pred_fallthru
      _
    %341 = vsyncpa [#allocation3], 1
    %342 = vsyncpa [#allocation6], 1
    %343 = vsyncpa [#allocation9], 1
    %344 = vsyncpa [#allocation4], 1

</llo_original>
